<compile_context>
chip_gen: v5e
topology: v5e:2x2
jax: 0.10.0
libtpu: 0.0.40
codegen_flags: <defaults>
</compile_context>

<pallas_src>
import functools

import jax
import jax.numpy as jnp
import numpy as np
from jax import lax
from jax.experimental import pallas as pl
from jax.experimental.pallas import tpu as pltpu


# ---------------------------------------------------------------------------
# Kernels
# ---------------------------------------------------------------------------
def _squeeze_kernel(x_ref, o_ref):
    # x_ref: (Cb*H, W)          fused (channel, row) view of the input tile
    # o_ref: (Cb, 4, H/2, W/2)  output channels 4c + 2i + j
    cb, _, hh, wh = o_ref.shape
    w = x_ref.shape[-1]
    dt = x_ref.dtype

    # One-hot column selectors Sel_j[2w + j, w] = 1, generated on the VPU
    # (no HBM read, no double-buffered VMEM operand).
    rows = lax.broadcasted_iota(jnp.int32, (w, wh), 0)
    cols = lax.broadcasted_iota(jnp.int32, (w, wh), 1)
    sel = [(rows == 2 * cols + j).astype(dt) for j in range(2)]   # (W, W/2)

    for i in range(2):
        # Rows 2h + i of every channel: cheap sublane stride-2 load
        # (replaces the old (H/2, H) x (H, W) row-selector matmul).
        rows_i = x_ref[pl.ds(i, cb * hh, stride=2), :]            # (Cb*H/2, W)
        for j in range(2):
            # Lane de-interleave via exact 0/1 selection on the MXU.
            res = jnp.dot(rows_i, sel[j], preferred_element_type=jnp.float32)
            o_ref[:, 2 * i + j, :, :] = (
                res.reshape(cb, hh, wh).astype(o_ref.dtype))


def _unsqueeze_kernel(x_ref, o_ref):
    # x_ref: (Cb, 4, H, W)   input channels 4c + 2i + j of Cb output channels
    # o_ref: (Cb*2H, 2W)     fused (channel, row) view of the output tile
    cb, _, h, w = x_ref.shape
    dt = x_ref.dtype

    # One-hot column scatter matrices V_j[p, 2p + j] = 1, generated in-kernel.
    rows = lax.broadcasted_iota(jnp.int32, (w, 2 * w), 0)
    cols = lax.broadcasted_iota(jnp.int32, (w, 2 * w), 1)
    scat = [(cols == 2 * rows + j).astype(dt) for j in range(2)]  # (W, 2W)

    for i in range(2):
        x0 = x_ref[:, 2 * i, :, :].reshape(cb * h, w)
        x1 = x_ref[:, 2 * i + 1, :, :].reshape(cb * h, w)
        # j = 0 / j = 1 contributions land on disjoint lanes, so the sum is
        # exact and there is no full-size (2H, 2W) accumulator.
        t = (jnp.dot(x0, scat[0], preferred_element_type=jnp.float32)
             + jnp.dot(x1, scat[1], preferred_element_type=jnp.float32))
        # Rows 2h + i of every output channel: sublane stride-2 store.
        # The two parities together fully cover the output block.
        o_ref[pl.ds(i, cb * h, stride=2), :] = t.astype(o_ref.dtype)


# ---------------------------------------------------------------------------
# Block sizing
# ---------------------------------------------------------------------------
def _channels_per_step(n_ch, rows_per_ch, inner_rows, row_bytes,
                       target_bytes=2 << 20):
    """How many channels one grid step handles.

    Constraints:
      * divides n_ch (grid = n_ch // cb),
      * (cb * rows_per_ch) % 8 == 0 (sublane-aligned fused block) or cb is the
        full extent (always a legal BlockSpec),
      * inner_rows % 8 == 0 or cb == 1, so the in-kernel merge/split reshape
        between (cb*inner, lanes) and (cb, inner, lanes) is a layout no-op,
      * block stays under ~target_bytes so in+out double-buffering fits VMEM.
    """
    candidates = []
    for d in range(1, n_ch + 1):
        if n_ch % d:
            continue
        if (d * rows_per_ch) % 8 and d != n_ch:
            continue
        if inner_rows % 8 and d != 1:
            continue
        candidates.append(d)
    if not candidates:
        return n_ch
    fitting = [d for d in candidates
               if d * rows_per_ch * row_bytes <= target_bytes]
    return max(fitting) if fitting else min(candidates)


# ---------------------------------------------------------------------------
# Wrapper (equivalent of Squeeze2d.forward)
# ---------------------------------------------------------------------------
@functools.partial(jax.jit, static_argnames=("undo_squeeze",))
def squeeze2d(x, undo_squeeze: bool = False):
    B, C, H, W = x.shape
    itemsize = jnp.dtype(x.dtype).itemsize

    if not undo_squeeze:
        assert H % 2 == 0 and W % 2 == 0
        Hh, Wh = H // 2, W // 2
        cb = _channels_per_step(C, H, Hh, W * itemsize)
        x_fused = x.reshape(B, C * H, W)                       # free reshape
        out = pl.pallas_call(
            _squeeze_kernel,
            out_shape=jax.ShapeDtypeStruct((B, C, 4, Hh, Wh), x.dtype),
            grid=(B, C // cb),
            in_specs=[
                pl.BlockSpec((None, cb * H, W), lambda b, c: (b, c, 0)),
            ],
            out_specs=pl.BlockSpec((None, cb, 4, Hh, Wh),
                                   lambda b, c: (b, c, 0, 0, 0)),
            compiler_params=pltpu.CompilerParams(
                dimension_semantics=("parallel", "parallel")),
        )(x_fused)
        return out.reshape(B, 4 * C, Hh, Wh)                   # free reshape
    else:
        assert C % 4 == 0
        Co = C // 4
        cb = _channels_per_step(Co, 2 * H, H, 2 * W * itemsize)
        x_split = x.reshape(B, Co, 4, H, W)                    # free reshape
        out = pl.pallas_call(
            _unsqueeze_kernel,
            out_shape=jax.ShapeDtypeStruct((B, Co * 2 * H, 2 * W), x.dtype),
            grid=(B, Co // cb),
            in_specs=[
                pl.BlockSpec((None, cb, 4, H, W),
                             lambda b, c: (b, c, 0, 0, 0)),
            ],
            out_specs=pl.BlockSpec((None, cb * 2 * H, 2 * W),
                                   lambda b, c: (b, c, 0)),
            compiler_params=pltpu.CompilerParams(
                dimension_semantics=("parallel", "parallel")),
        )(x_split)
        return out.reshape(B, Co, 2 * H, 2 * W)                # free reshape


# ---------------------------------------------------------------------------
# Pure-JAX reference (mirrors the PyTorch forward exactly)
# ---------------------------------------------------------------------------
def _ref_squeeze2d(x, undo_squeeze: bool):
    B, C, H, W = x.shape
    if not undo_squeeze:
        x = x.reshape(B, C, H // 2, 2, W // 2, 2)
        x = jnp.transpose(x, (0, 1, 3, 5, 2, 4))
        return x.reshape(B, C * 4, H // 2, W // 2)
    else:
        x = x.reshape(B, C // 4, 2, 2, H, W)
        x = jnp.transpose(x, (0, 1, 4, 2, 5, 3))
        return x.reshape(B, C // 4, H * 2, W * 2)


if __name__ == "__main__":
    key = jax.random.PRNGKey(0)
    x = jax.random.normal(key, (2, 4, 16, 16), dtype=jnp.float32)

    # squeeze: (2, 4, 16, 16) -> (2, 16, 8, 8)
    y = squeeze2d(x, undo_squeeze=False)
    jax.block_until_ready(y)
    y_ref = _ref_squeeze2d(x, False)
    np.testing.assert_allclose(np.asarray(y), np.asarray(y_ref),
                               rtol=1e-6, atol=1e-6)

    # undo squeeze: (2, 16, 8, 8) -> (2, 4, 16, 16), must round-trip exactly
    x_rec = squeeze2d(y, undo_squeeze=True)
    jax.block_until_ready(x_rec)
    x_ref = _ref_squeeze2d(y_ref, True)
    np.testing.assert_allclose(np.asarray(x_rec), np.asarray(x_ref),
                               rtol=1e-6, atol=1e-6)
    np.testing.assert_allclose(np.asarray(x_rec), np.asarray(x),
                               rtol=1e-6, atol=1e-6)

    print("KERNEL_OK")
</pallas_src>

<mosaic_0001>
module attributes {stable_mosaic.version = 11 : i64} {
  func.func @_squeeze_kernel(%arg0: i32, %arg1: i32, %arg2: memref<1x64x16xf32, #tpu.memory_space<vmem>>, %arg3: memref<1x4x4x8x8xf32, #tpu.memory_space<vmem>>) attributes {dimension_semantics = [#tpu.dimension_semantics<parallel>, #tpu.dimension_semantics<parallel>], iteration_bounds = array<i64: 2, 1>, scalar_prefetch = 0 : i64, scratch_operands = 0 : i64, tpu.core_type = #tpu.core_type<tc>, window_params = [{transform_indices = @transform_0, window_bounds = array<i64: 1, 64, 16>}, {transform_indices = @transform_1, window_bounds = array<i64: 1, 4, 4, 8, 8>}]} {
    %0 = tpu.iota {dimensions = array<i32: 0>} : vector<16x8xi32>
    %1 = tpu.iota {dimensions = array<i32: 1>} : vector<16x8xi32>
    %c2_i32 = arith.constant 2 : i32
    %2 = vector.broadcast %c2_i32 : i32 to vector<16x8xi32>
    %3 = arith.muli %2, %1 : vector<16x8xi32>
    %c0_i32 = arith.constant 0 : i32
    %4 = vector.broadcast %c0_i32 : i32 to vector<16x8xi32>
    %5 = arith.addi %3, %4 : vector<16x8xi32>
    %6 = arith.cmpi eq, %0, %5 : vector<16x8xi32>
    %7 = arith.extui %6 : vector<16x8xi1> to vector<16x8xi32>
    %8 = arith.sitofp %7 : vector<16x8xi32> to vector<16x8xf32>
    %c2_i32_0 = arith.constant 2 : i32
    %9 = vector.broadcast %c2_i32_0 : i32 to vector<16x8xi32>
    %10 = arith.muli %9, %1 : vector<16x8xi32>
    %c1_i32 = arith.constant 1 : i32
    %11 = vector.broadcast %c1_i32 : i32 to vector<16x8xi32>
    %12 = arith.addi %10, %11 : vector<16x8xi32>
    %13 = arith.cmpi eq, %0, %12 : vector<16x8xi32>
    %14 = arith.extui %13 : vector<16x8xi1> to vector<16x8xi32>
    %15 = arith.sitofp %14 : vector<16x8xi32> to vector<16x8xf32>
    %c0 = arith.constant 0 : index
    %c0_1 = arith.constant 0 : index
    %c0_2 = arith.constant 0 : index
    %16 = tpu.strided_load %arg2[%c0, %c0_1, %c0_2] {strides = array<i32: 1, 2, 1>} : memref<1x64x16xf32, #tpu.memory_space<vmem>>, vector<1x32x16xf32>
    %17 = vector.shape_cast %16 : vector<1x32x16xf32> to vector<32x16xf32>
    %cst = arith.constant dense<0.000000e+00> : vector<32x8xf32>
    %18 = tpu.matmul %17, %8, %cst {dimension_numbers = #tpu.dot_dimension_numbers<[1], [0], [0], [1], [0, 0, 1, 1], [], []>} : vector<32x16xf32>, vector<16x8xf32>, vector<32x8xf32> -> vector<32x8xf32>
    %19 = vector.shape_cast %18 : vector<32x8xf32> to vector<4x8x8xf32>
    %c0_3 = arith.constant 0 : index
    %c0_4 = arith.constant 0 : index
    %c0_5 = arith.constant 0 : index
    %c0_6 = arith.constant 0 : index
    %c0_7 = arith.constant 0 : index
    %20 = vector.load %arg3[%c0_3, %c0_4, %c0_5, %c0_6, %c0_7] : memref<1x4x4x8x8xf32, #tpu.memory_space<vmem>>, vector<1x4x1x8x8xf32>
    %21 = vector.shape_cast %20 : vector<1x4x1x8x8xf32> to vector<4x8x8xf32>
    %22 = vector.shape_cast %19 : vector<4x8x8xf32> to vector<1x4x1x8x8xf32>
    tpu.vector_store %arg3[%c0_3, %c0_4, %c0_5, %c0_6, %c0_7], %22 {strides = array<i32>} : memref<1x4x4x8x8xf32, #tpu.memory_space<vmem>>, vector<1x4x1x8x8xf32>,
    %cst_8 = arith.constant dense<0.000000e+00> : vector<32x8xf32>
    %23 = tpu.matmul %17, %15, %cst_8 {dimension_numbers = #tpu.dot_dimension_numbers<[1], [0], [0], [1], [0, 0, 1, 1], [], []>} : vector<32x16xf32>, vector<16x8xf32>, vector<32x8xf32> -> vector<32x8xf32>
    %24 = vector.shape_cast %23 : vector<32x8xf32> to vector<4x8x8xf32>
    %c0_9 = arith.constant 0 : index
    %c0_10 = arith.constant 0 : index
    %c1 = arith.constant 1 : index
    %c0_11 = arith.constant 0 : index
    %c0_12 = arith.constant 0 : index
    %25 = vector.load %arg3[%c0_9, %c0_10, %c1, %c0_11, %c0_12] : memref<1x4x4x8x8xf32, #tpu.memory_space<vmem>>, vector<1x4x1x8x8xf32>
    %26 = vector.shape_cast %25 : vector<1x4x1x8x8xf32> to vector<4x8x8xf32>
    %27 = vector.shape_cast %24 : vector<4x8x8xf32> to vector<1x4x1x8x8xf32>
    tpu.vector_store %arg3[%c0_9, %c0_10, %c1, %c0_11, %c0_12], %27 {strides = array<i32>} : memref<1x4x4x8x8xf32, #tpu.memory_space<vmem>>, vector<1x4x1x8x8xf32>,
    %c0_13 = arith.constant 0 : index
    %c1_14 = arith.constant 1 : index
    %c0_15 = arith.constant 0 : index
    %28 = tpu.strided_load %arg2[%c0_13, %c1_14, %c0_15] {strides = array<i32: 1, 2, 1>} : memref<1x64x16xf32, #tpu.memory_space<vmem>>, vector<1x32x16xf32>
    %29 = vector.shape_cast %28 : vector<1x32x16xf32> to vector<32x16xf32>
    %cst_16 = arith.constant dense<0.000000e+00> : vector<32x8xf32>
    %30 = tpu.matmul %29, %8, %cst_16 {dimension_numbers = #tpu.dot_dimension_numbers<[1], [0], [0], [1], [0, 0, 1, 1], [], []>} : vector<32x16xf32>, vector<16x8xf32>, vector<32x8xf32> -> vector<32x8xf32>
    %31 = vector.shape_cast %30 : vector<32x8xf32> to vector<4x8x8xf32>
    %c0_17 = arith.constant 0 : index
    %c0_18 = arith.constant 0 : index
    %c2 = arith.constant 2 : index
    %c0_19 = arith.constant 0 : index
    %c0_20 = arith.constant 0 : index
    %32 = vector.load %arg3[%c0_17, %c0_18, %c2, %c0_19, %c0_20] : memref<1x4x4x8x8xf32, #tpu.memory_space<vmem>>, vector<1x4x1x8x8xf32>
    %33 = vector.shape_cast %32 : vector<1x4x1x8x8xf32> to vector<4x8x8xf32>
    %34 = vector.shape_cast %31 : vector<4x8x8xf32> to vector<1x4x1x8x8xf32>
    tpu.vector_store %arg3[%c0_17, %c0_18, %c2, %c0_19, %c0_20], %34 {strides = array<i32>} : memref<1x4x4x8x8xf32, #tpu.memory_space<vmem>>, vector<1x4x1x8x8xf32>,
    %cst_21 = arith.constant dense<0.000000e+00> : vector<32x8xf32>
    %35 = tpu.matmul %29, %15, %cst_21 {dimension_numbers = #tpu.dot_dimension_numbers<[1], [0], [0], [1], [0, 0, 1, 1], [], []>} : vector<32x16xf32>, vector<16x8xf32>, vector<32x8xf32> -> vector<32x8xf32>
    %36 = vector.shape_cast %35 : vector<32x8xf32> to vector<4x8x8xf32>
    %c0_22 = arith.constant 0 : index
    %c0_23 = arith.constant 0 : index
    %c3 = arith.constant 3 : index
    %c0_24 = arith.constant 0 : index
    %c0_25 = arith.constant 0 : index
    %37 = vector.load %arg3[%c0_22, %c0_23, %c3, %c0_24, %c0_25] : memref<1x4x4x8x8xf32, #tpu.memory_space<vmem>>, vector<1x4x1x8x8xf32>
    %38 = vector.shape_cast %37 : vector<1x4x1x8x8xf32> to vector<4x8x8xf32>
    %39 = vector.shape_cast %36 : vector<4x8x8xf32> to vector<1x4x1x8x8xf32>
    tpu.vector_store %arg3[%c0_22, %c0_23, %c3, %c0_24, %c0_25], %39 {strides = array<i32>} : memref<1x4x4x8x8xf32, #tpu.memory_space<vmem>>, vector<1x4x1x8x8xf32>,
    return
  }
  func.func @transform_0(%arg0: i32, %arg1: i32) -> (i32, i32, i32) {
    %c0_i32 = arith.constant 0 : i32
    %c0_i32_0 = arith.constant 0 : i32
    return %arg0, %arg1, %c0_i32 : i32, i32, i32
  }
  func.func @transform_1(%arg0: i32, %arg1: i32) -> (i32, i32, i32, i32, i32) {
    %c0_i32 = arith.constant 0 : i32
    %c0_i32_0 = arith.constant 0 : i32
    %c0_i32_1 = arith.constant 0 : i32
    %c0_i32_2 = arith.constant 0 : i32
    return %arg0, %arg1, %c0_i32, %c0_i32_0, %c0_i32_1 : i32, i32, i32, i32, i32
  }
}

</mosaic_0001>

<llo_original>
// kernel: squeeze2d.1
$region0: #{squeeze2d.1}
  #allocation0 [shape = 'u32[]', space=smem, size = 0x4, offset = 0x4, fixed_abs, tag = 'smem constant byte address 0x4 - core index']
  #allocation1 [shape = 'u32[72,128]{1,0:T(1,128)}', space=vmem, size = 0x9000, scoped, tag = 'internal scratch']
  %s0 = inlined_call_operand.hbm [shape: f32[2,64,16], index: 0, kind: input, shape index: {}]
  %s1 = inlined_call_operand.vmem [shape: f32[2,4,4,8,8], index: 1, kind: output, shape index: {}]
  %s2 = sld [smem:[#allocation0]]
  $region41: #{squeeze2d.1} parent=0
    _
  %s4 = ssub.s32 1, %s2
  %s5 = scalar_select 0, %s4, %s2
  $region1: #{squeeze2d.1} parent=0
    #allocation2 [shape = 'u8[65536]{0}', space=vmem, size = 0x10000, scoped, tag = 'input window, operand 0']
    #allocation3 [shape = 's32[2]{0}', space=sflag, size = 0x8, scoped, tag = 'scoped memory for squeeze2d.1']
    %6 = vsyncpa [#allocation3], 0
    %s7 = scalar_lea.sflag [#allocation3], 1
    %8 = vsyncpa %s7, 0
    loop: start=0, step=1, limit=4
    $region2: #{squeeze2d.1} parent=1 // loop_pre_header
      _
    $region3: #{squeeze2d.1} parent=1 // loop_header
      %s10 = sphi 0, %s14
      %p11 = scmp.ge.s32.totalorder %s10, 4
      %s17 = sphi 0, %s29
      %s18 = sphi 0, %s25
      %s19 = sphi 0, %s17
      %s20 = sphi 0, %s18
      %s21 = sphi 0, %s19
      %s22 = sphi 0, %s20
      %s34 = sphi 0, %s36
      %s37 = sphi 0, %s34
      %s38 = sphi 0, %s37
      %s54 = sphi 0, %s38
      %s62 = sphi 0, %s64
      %s65 = sphi 0, %s62
      %s66 = sphi 0, %s65
      %s82 = sphi 0, %s66
    $region4: #{squeeze2d.1} parent=1 // loop_header_branch
      %13 = sbr.rel (%p11) target = $region8
    $region5: #{squeeze2d.1} parent=1 // loop_body
      %s15 = ssub.s32 %s10, 1
      %s16 = ssub.s32 %s10, 2
      %s23 = sadd.s32 1, %s18
      %p24 = scmp.ge.s32.totalorder %s23, 1
      %s25 = scalar_select %p24, 0, %s23
      %s26 = sadd.s32 1, %s17
      %s27 = scalar_select %p24, %s26, %s17
      %p28 = scmp.ge.s32.totalorder %s27, 2
      %s29 = scalar_select %p28, 0, %s27
      %s30 = ssub.s32 %s17, %s29
      %s31 = ssub.s32 %s18, %s25
      %s32 = sor.u32 %s30, %s31
      %p33 = scmp.eq.s32.totalorder %s32, 0
      %s35 = sadd.s32 %s34, 1
      %s36 = scalar_select %p33, %s34, %s35
      %p39 = pneg %p33
      %p40 = scmp.eq.s32.totalorder %s10, 1
      %p41 = por %p39, %p40
      %p42 = scmp.ne.s32.totalorder %s34, %s37
      %p43 = scmp.eq.s32.totalorder %s10, 0
      %p44 = por %p42, %p43
      %p45 = scmp.ne.s32.totalorder %s34, %s37
      %p46 = scmp.eq.s32.totalorder %s15, 1
      %p47 = por %p45, %p46
      %p48 = scmp.ne.s32.totalorder %s37, %s38
      %p49 = scmp.eq.s32.totalorder %s15, 0
      %p50 = por %p48, %p49
      %p51 = scmp.ne.s32.totalorder %s37, %s38
      %p52 = scmp.eq.s32.totalorder %s16, 1
      %p53 = por %p51, %p52
      %p55 = scmp.ne.s32.totalorder %s38, %s54
      %p56 = scmp.eq.s32.totalorder %s16, 0
      %p57 = por %p55, %p56
      %s58 = ssub.s32 %s17, %s29
      %s59 = ssub.s32 %s18, %s25
      %s60 = sor.u32 %s58, %s59
      %p61 = scmp.eq.s32.totalorder %s60, 0
      %s63 = sadd.s32 %s62, 1
      %s64 = scalar_select %p61, %s62, %s63
      %p67 = pneg %p61
      %p68 = scmp.eq.s32.totalorder %s10, 1
      %p69 = por %p67, %p68
      %p70 = scmp.ne.s32.totalorder %s62, %s65
      %p71 = scmp.eq.s32.totalorder %s10, 0
      %p72 = por %p70, %p71
      %p73 = scmp.ne.s32.totalorder %s62, %s65
      %p74 = scmp.eq.s32.totalorder %s15, 1
      %p75 = por %p73, %p74
      %p76 = scmp.ne.s32.totalorder %s65, %s66
      %p77 = scmp.eq.s32.totalorder %s15, 0
      %p78 = por %p76, %p77
      %p79 = scmp.ne.s32.totalorder %s65, %s66
      %p80 = scmp.eq.s32.totalorder %s16, 1
      %p81 = por %p79, %p80
      %p83 = scmp.ne.s32.totalorder %s66, %s82
      %p84 = scmp.eq.s32.totalorder %s16, 0
      %p85 = por %p83, %p84
      %p86 = scmp.le.s32.totalorder 1, %s10
      %p87 = scmp.lt.s32.totalorder %s10, 3
      %p88 = pnand %p86, %p87
      %p89 = pneg %p88
      // Predicated region
      $region9: #{squeeze2d.1} parent=5 // pred_check
        _
      $region10: #{squeeze2d.1} parent=5 // pred_check_branch
        %91 = sbr.rel (%p88) target = $region12
      $region11: #{squeeze2d.1} parent=5 // pred_region
        %s92 = ssub.s32 %s10, 1
      $region12: #{squeeze2d.1} parent=5 // pred_fallthru
        _
      %p93 = scmp.lt.s32.totalorder %s10, 2
      // Predicated region
      $region13: #{squeeze2d.1} parent=5 // pred_check
        %p94 = pneg %p93
      $region14: #{squeeze2d.1} parent=5 // pred_check_branch
        %96 = sbr.rel (%p94) target = $region16
      $region15: #{squeeze2d.1} parent=5 // pred_region
        // Predicated region
        $region17: #{squeeze2d.1} parent=15 // pred_check
          %p97 = pneg %p44
        $region18: #{squeeze2d.1} parent=15 // pred_check_branch
          %99 = sbr.rel (%p97) target = $region20
        $region19: #{squeeze2d.1} parent=15 // pred_region
          %s100 = sand.u32 %s34, 1
          %s101 = scalar_lea.sflag [#allocation3], %s100
          %s102 = sand.u32 %s34, 1
          %s103 = smul.addr %s102, 64
          %s104 = scalar_lea.vmem [#allocation2], %s103
          %s105 = smul.u32 8, %s18
          %107 = vsyncadd %s101, 0
          %s108 = smul.addr %s17, 8
          %s109 = sadd.s32 %s105, %s108
          %s110 = smul.addr %s109, 8
          %s111 = scalar_lea.hbm %s0, %s110
          %s112 = sshll.u32 %s111, 4
          %s113 = int_to_ptr.hbm [resolvable:$true] %s112
          %s114 = sshll.u32 %s104, 4
          %s115 = int_to_ptr.vmem [resolvable:$true] %s114
          %120 = dma.hbm_to_vmem [thread:$0]  %s113, 1024, %s115, %s101, 128, 128, 8
        $region20: #{squeeze2d.1} parent=15 // pred_fallthru
          _
      $region16: #{squeeze2d.1} parent=5 // pred_fallthru
        _
      %p121 = scmp.le.s32.totalorder 1, %s10
      %p122 = scmp.lt.s32.totalorder %s10, 3
      %p123 = pnand %p121, %p122
      %p124 = pneg %p123
      // Predicated region
      $region21: #{squeeze2d.1} parent=5 // pred_check
        _
      $region22: #{squeeze2d.1} parent=5 // pred_check_branch
        %126 = sbr.rel (%p123) target = $region24
      $region23: #{squeeze2d.1} parent=5 // pred_region
        %s127 = ssub.s32 %s10, 1
        %s128 = sand.u32 %s37, 1
        %s129 = scalar_lea.sflag [#allocation3], %s128
        %s130 = sand.u32 %s37, 1
        %s131 = smul.addr %s130, 64
        %s132 = scalar_lea.vmem [#allocation2], %s131
        // Predicated region
        $region25: #{squeeze2d.1} parent=23 // pred_check
          %p133 = pneg %p50
        $region26: #{squeeze2d.1} parent=23 // pred_check_branch
          %135 = sbr.rel (%p133) target = $region28
        $region27: #{squeeze2d.1} parent=23 // pred_region
          %137 = dma.done %s129, 1024
        $region28: #{squeeze2d.1} parent=23 // pred_fallthru
          _
        %s138 = sand.u32 %s37, 1
        %s139 = scalar_lea.sflag [#allocation3], %s138
        %s140 = sand.u32 %s37, 1
        %s141 = smul.addr %s140, 64
        %s142 = scalar_lea.vmem [#allocation2], %s141
        %p143 = pneg %p50
        %p144 = pneg %p47
        %p145 = pneg %p78
        %p146 = pneg %p75
        %s147 = smul.u32 4, %s20
        %p148 = scmp.lt.s32.totalorder %s19, 1
        %s149 = scalar_select %p148, %s19, 1
        %p150 = scmp.lt.s32.totalorder %s147, 3
        %s151 = scalar_select %p150, %s147, 3
        %s152 = smul.addr %s151, 4
        %s153 = smul.addr %s149, 16
        %s154 = sadd.s32 %s152, %s153
        %s155 = smul.addr %s154, 8
        %s156 = scalar_lea.vmem %s1, %s155
        %s157 = smul.u32 8, %s20
        %s158 = smul.u32 4, %s20
        %p159 = scmp.lt.s32.totalorder %s19, 1
        %s160 = scalar_select %p159, %s19, 1
        %p161 = scmp.lt.s32.totalorder %s158, 3
        %s162 = scalar_select %p161, %s158, 3
        %s163 = smul.addr %s162, 4
        %s164 = smul.addr %s160, 16
        %s165 = sadd.s32 %s163, %s164
        %s166 = smul.addr %s165, 8
        %s167 = scalar_lea.vmem %s1, %s166
        %s168 = smul.u32 4, %s20
        %v169 = vlaneseq
        %v170 = vshrl.u32 %v169, 7
        %v171 = vadd.s32 %v170, 8
        %v172 = vlaneseq
        %v173 = vand.u32 %v172, 127
        %v174 = vmul.u32 %v173, 2
        %vm175 = vcmp.eq.s32.totalorder %v170, %v174
        %vm176 = vcmp.eq.s32.totalorder %v171, %v174
        %v177 = vsel %vm175, 1, 0
        %v178 = vsel %vm176, 1, 0
        %v179 = vcvt.s32.f32 %v177
        %v180 = vcvt.s32.f32 %v178
        %v181 = vadd.s32 %v174, 1
        %vm182 = vcmp.eq.s32.totalorder %v170, %v181
        %vm183 = vcmp.eq.s32.totalorder %v171, %v181
        %v184 = vsel %vm182, 1, 0
        %v185 = vsel %vm183, 1, 0
        %v186 = vcvt.s32.f32 %v184
        %v187 = vcvt.s32.f32 %v185
        %v188 = vld [vmem:[%s132] ss:$2 sm:$0xff]
        %s189 = scalar_lea.vmem %s132, 16 [#allocation2]
        %v190 = vld [vmem:[%s189] ss:$2 sm:$0xff]
        %s191 = scalar_lea.vmem %s132, 32 [#allocation2]
        %v192 = vld [vmem:[%s191] ss:$2 sm:$0xff]
        %s193 = scalar_lea.vmem %s132, 48 [#allocation2]
        %v194 = vld [vmem:[%s193] ss:$2 sm:$0xff]
        %vm195 = vcmask 130048
        %v197 = vsel %vm195, %v188, 0
        %v200 = vsel %vm195, %v190, 0
        %v203 = vsel %vm195, %v192, 0
        %v206 = vsel %vm195, %v194, 0
        %208 = vmatpush.msra.mxu0 0.0
        %209 = vmatpush.msra.mxu0 0.0
        %210 = vmatpush.msra.mxu0 0.0
        %211 = vmatpush.msra.mxu0 0.0
        %212 = vmatpush.msra.mxu0 0.0
        %213 = vmatpush.msra.mxu0 0.0
        %214 = vmatpush.msra.mxu0 0.0
        %215 = vmatpush.msra.mxu0 0.0
        %216 = vmatpush.msra.mxu0 0.0
        %217 = vmatpush.msra.mxu0 0.0
        %218 = vmatpush.msra.mxu0 0.0
        %219 = vmatpush.msra.mxu0 0.0
        %220 = vmatpush.msra.mxu0 0.0
        %221 = vmatpush.msra.mxu0 0.0
        %222 = vmatpush.msra.mxu0 %v180
        %223 = vmatpush.msra.mxu0 %v179
        %224 = vmatmul.f32.gmra.mxu0 %v197
        %v225 = vpop.f32.mrf.mxu0
        %v226 = vadd.f32 0.0, %v225
        %227 = vmatmul.f32.gmra.mxu0 %v200
        %v228 = vpop.f32.mrf.mxu0
        %v229 = vadd.f32 0.0, %v228
        %230 = vmatmul.f32.gmra.mxu0 %v203
        %v231 = vpop.f32.mrf.mxu0
        %v232 = vadd.f32 0.0, %v231
        %233 = vmatmul.f32.gmra.mxu0 %v206
        %v234 = vpop.f32.mrf.mxu0
        %v235 = vadd.f32 0.0, %v234
        %236 = vdwg.mxu0
        %vm237 = vcmask 64512
        %238 = vst.msk [vmem:[%s167] sm:$0xff] %vm237, %v226
        %239 = vst.msk [vmem:[%s167 + $0x20] sm:$0xff] %vm237, %v229
        %240 = vst.msk [vmem:[%s167 + $0x40] sm:$0xff] %vm237, %v232
        %241 = vst.msk [vmem:[%s167 + $0x60] sm:$0xff] %vm237, %v235
        %242 = vmatpush.msra.mxu0 0.0
        %243 = vmatpush.msra.mxu0 0.0
        %244 = vmatpush.msra.mxu0 0.0
        %245 = vmatpush.msra.mxu0 0.0
        %246 = vmatpush.msra.mxu0 0.0
        %247 = vmatpush.msra.mxu0 0.0
        %248 = vmatpush.msra.mxu0 0.0
        %249 = vmatpush.msra.mxu0 0.0
        %250 = vmatpush.msra.mxu0 0.0
        %251 = vmatpush.msra.mxu0 0.0
        %252 = vmatpush.msra.mxu0 0.0
        %253 = vmatpush.msra.mxu0 0.0
        %254 = vmatpush.msra.mxu0 0.0
        %255 = vmatpush.msra.mxu0 0.0
        %256 = vmatpush.msra.mxu0 %v187
        %257 = vmatpush.msra.mxu0 %v186
        %258 = vmatmul.f32.gmra.mxu0 %v197
        %v259 = vpop.f32.mrf.mxu0
        %v260 = vadd.f32 0.0, %v259
        %261 = vmatmul.f32.gmra.mxu0 %v200
        %v262 = vpop.f32.mrf.mxu0
        %v263 = vadd.f32 0.0, %v262
        %264 = vmatmul.f32.gmra.mxu0 %v203
        %v265 = vpop.f32.mrf.mxu0
        %v266 = vadd.f32 0.0, %v265
        %267 = vmatmul.f32.gmra.mxu0 %v206
        %v268 = vpop.f32.mrf.mxu0
        %v269 = vadd.f32 0.0, %v268
        %270 = vdwg.mxu0
        %s271 = scalar_lea.vmem %s167, 8
        %272 = vst.msk [vmem:[%s271] sm:$0xff] %vm237, %v260
        %273 = vst.msk [vmem:[%s271 + $0x20] sm:$0xff] %vm237, %v263
        %274 = vst.msk [vmem:[%s271 + $0x40] sm:$0xff] %vm237, %v266
        %275 = vst.msk [vmem:[%s271 + $0x60] sm:$0xff] %vm237, %v269
        %s276 = scalar_lea.vmem %s132, 1 [#allocation2]
        %v277 = vld [vmem:[%s276] ss:$2 sm:$0xff]
        %s278 = scalar_lea.vmem %s132, 17 [#allocation2]
        %v279 = vld [vmem:[%s278] ss:$2 sm:$0xff]
        %s280 = scalar_lea.vmem %s132, 33 [#allocation2]
        %v281 = vld [vmem:[%s280] ss:$2 sm:$0xff]
        %s282 = scalar_lea.vmem %s132, 49 [#allocation2]
        %v283 = vld [vmem:[%s282] ss:$2 sm:$0xff]
        %v285 = vsel %vm195, %v277, 0
        %v288 = vsel %vm195, %v279, 0
        %v291 = vsel %vm195, %v281, 0
        %v294 = vsel %vm195, %v283, 0
        %296 = vmatpush.msra.mxu0 0.0
        %297 = vmatpush.msra.mxu0 0.0
        %298 = vmatpush.msra.mxu0 0.0
        %299 = vmatpush.msra.mxu0 0.0
        %300 = vmatpush.msra.mxu0 0.0
        %301 = vmatpush.msra.mxu0 0.0
        %302 = vmatpush.msra.mxu0 0.0
        %303 = vmatpush.msra.mxu0 0.0
        %304 = vmatpush.msra.mxu0 0.0
        %305 = vmatpush.msra.mxu0 0.0
        %306 = vmatpush.msra.mxu0 0.0
        %307 = vmatpush.msra.mxu0 0.0
        %308 = vmatpush.msra.mxu0 0.0
        %309 = vmatpush.msra.mxu0 0.0
        %310 = vmatpush.msra.mxu0 %v180
        %311 = vmatpush.msra.mxu0 %v179
        %312 = vmatmul.f32.gmra.mxu0 %v285
        %v313 = vpop.f32.mrf.mxu0
        %v314 = vadd.f32 0.0, %v313
        %315 = vmatmul.f32.gmra.mxu0 %v288
        %v316 = vpop.f32.mrf.mxu0
        %v317 = vadd.f32 0.0, %v316
        %318 = vmatmul.f32.gmra.mxu0 %v291
        %v319 = vpop.f32.mrf.mxu0
        %v320 = vadd.f32 0.0, %v319
        %321 = vmatmul.f32.gmra.mxu0 %v294
        %v322 = vpop.f32.mrf.mxu0
        %v323 = vadd.f32 0.0, %v322
        %324 = vdwg.mxu0
        %s325 = scalar_lea.vmem %s167, 16
        %326 = vst.msk [vmem:[%s325] sm:$0xff] %vm237, %v314
        %327 = vst.msk [vmem:[%s325 + $0x20] sm:$0xff] %vm237, %v317
        %328 = vst.msk [vmem:[%s325 + $0x40] sm:$0xff] %vm237, %v320
        %329 = vst.msk [vmem:[%s325 + $0x60] sm:$0xff] %vm237, %v323
        %330 = vmatpush.msra.mxu0 0.0
        %331 = vmatpush.msra.mxu0 0.0
        %332 = vmatpush.msra.mxu0 0.0
        %333 = vmatpush.msra.mxu0 0.0
        %334 = vmatpush.msra.mxu0 0.0
        %335 = vmatpush.msra.mxu0 0.0
        %336 = vmatpush.msra.mxu0 0.0
        %337 = vmatpush.msra.mxu0 0.0
        %338 = vmatpush.msra.mxu0 0.0
        %339 = vmatpush.msra.mxu0 0.0
        %340 = vmatpush.msra.mxu0 0.0
        %341 = vmatpush.msra.mxu0 0.0
        %342 = vmatpush.msra.mxu0 0.0
        %343 = vmatpush.msra.mxu0 0.0
        %344 = vmatpush.msra.mxu0 %v187
        %345 = vmatpush.msra.mxu0 %v186
        %346 = vmatmul.f32.gmra.mxu0 %v285
        %v347 = vpop.f32.mrf.mxu0
        %v348 = vadd.f32 0.0, %v347
        %349 = vmatmul.f32.gmra.mxu0 %v288
        %v350 = vpop.f32.mrf.mxu0
        %v351 = vadd.f32 0.0, %v350
        %352 = vmatmul.f32.gmra.mxu0 %v291
        %v353 = vpop.f32.mrf.mxu0
        %v354 = vadd.f32 0.0, %v353
        %355 = vmatmul.f32.gmra.mxu0 %v294
        %v356 = vpop.f32.mrf.mxu0
        %v357 = vadd.f32 0.0, %v356
        %358 = vdwg.mxu0
        %s359 = scalar_lea.vmem %s167, 24
        %360 = vst.msk [vmem:[%s359] sm:$0xff] %vm237, %v348
        %361 = vst.msk [vmem:[%s359 + $0x20] sm:$0xff] %vm237, %v351
        %362 = vst.msk [vmem:[%s359 + $0x40] sm:$0xff] %vm237, %v354
        %363 = vst.msk [vmem:[%s359 + $0x60] sm:$0xff] %vm237, %v357
        %s364 = smul.u32 4, %s20
        %p365 = scmp.lt.s32.totalorder %s19, 1
        %s366 = scalar_select %p365, %s19, 1
        %p367 = scmp.lt.s32.totalorder %s364, 3
        %s368 = scalar_select %p367, %s364, 3
        %s369 = smul.addr %s368, 4
        %s370 = smul.addr %s366, 16
        %s371 = sadd.s32 %s369, %s370
        %s372 = smul.addr %s371, 8
        %s373 = scalar_lea.vmem %s1, %s372
        // Predicated region
        $region29: #{squeeze2d.1} parent=23 // pred_check
          %p374 = pneg %p75
        $region30: #{squeeze2d.1} parent=23 // pred_check_branch
          %376 = sbr.rel (%p374) target = $region32
        $region31: #{squeeze2d.1} parent=23 // pred_region
          %s377 = smul.u32 4, %s20
        $region32: #{squeeze2d.1} parent=23 // pred_fallthru
          _
      $region24: #{squeeze2d.1} parent=5 // pred_fallthru
        _
      %p378 = scmp.le.s32.totalorder 2, %s10
      // Predicated region
      $region33: #{squeeze2d.1} parent=5 // pred_check
        %p379 = pneg %p378
      $region34: #{squeeze2d.1} parent=5 // pred_check_branch
        %381 = sbr.rel (%p379) target = $region36
      $region35: #{squeeze2d.1} parent=5 // pred_region
        %s382 = ssub.s32 %s10, 2
        // Predicated region
        $region37: #{squeeze2d.1} parent=35 // pred_check
          %p383 = pneg %p81
        $region38: #{squeeze2d.1} parent=35 // pred_check_branch
          %385 = sbr.rel (%p383) target = $region40
        $region39: #{squeeze2d.1} parent=35 // pred_region
          %s386 = smul.u32 4, %s22
          %p387 = scmp.lt.s32.totalorder %s21, 1
          %s388 = scalar_select %p387, %s21, 1
          %p389 = scmp.lt.s32.totalorder %s386, 3
          %s390 = scalar_select %p389, %s386, 3
          %s391 = smul.addr %s390, 4
          %s392 = smul.addr %s388, 16
          %s393 = sadd.s32 %s391, %s392
          %s394 = smul.addr %s393, 8
          %s395 = scalar_lea.vmem %s1, %s394
        $region40: #{squeeze2d.1} parent=35 // pred_fallthru
          _
      $region36: #{squeeze2d.1} parent=5 // pred_fallthru
        _
    $region6: #{squeeze2d.1} parent=1 // loop_footer
      %s14 = sadd.s32 1, %s10
    $region7: #{squeeze2d.1} parent=1 // loop_footer_branch
      %9 = sbr.rel target = $region3
    $region8: #{squeeze2d.1} parent=1 // loop_exit
      _
    %396 = vsyncpa [#allocation3], 1
    %s397 = scalar_lea.sflag [#allocation3], 1
    %398 = vsyncpa %s397, 1

</llo_original>
